<compile_context>
chip_gen: v7x
topology: tpu7x:2x2x1
jax: 0.10.0
libtpu: 0.0.40
codegen_flags: <defaults>
</compile_context>

<pallas_src>
import functools
import math

import jax
import jax.numpy as jnp
from jax import lax
from jax.experimental import pallas as pl
from jax.experimental.pallas import tpu as pltpu


# ----------------------------------------------------------------------------
# Fused CSRA kernel: Linear head + mean pooling + token softmax + attention sum
# ----------------------------------------------------------------------------

def _csra_kernel(x_ref, w_ref, b_ref, o_ref, *, T, lam, n_tokens, n_pad, batch):
    # x_ref: [B*NP, D]  token rows, zero-padded (rows >= n_tokens are exactly 0)
    # w_ref: [D, D]     Linear weight in [in, out] layout (pre-transposed)
    # b_ref: [1, D]     Linear bias
    # o_ref: [B, D]
    w = w_ref[...]

    # One fused MXU matmul for every batch; bias folded into the epilogue.
    score = jnp.dot(x_ref[...], w, preferred_element_type=jnp.float32)  # [B*NP,D]

    d = score.shape[-1]
    # Additive mask that pushes pad rows to -inf before the token softmax.
    row = lax.broadcasted_iota(jnp.int32, (n_pad, d), 0)
    pad_neg = jnp.where(row < n_tokens, 0.0, -1e30)                      # [NP, D]

    inv_n = 1.0 / n_tokens
    outs = []
    for bi in range(batch):                      # B tiny & static -> unrolled
        sb = score[bi * n_pad:(bi + 1) * n_pad, :]   # 8-aligned static slice
        # base_logit = mean over real tokens (pad rows of sb are exactly 0).
        base = jnp.sum(sb, axis=0, keepdims=True) * inv_n                # [1, D]

        # softmax(score * T) over tokens; normalization deferred to the
        # single [1, D] epilogue row (never divide the [N, D] tile).
        s = sb * T + pad_neg
        m = jnp.max(s, axis=0, keepdims=True)
        p = jnp.exp(s - m)                       # pad rows underflow to 0
        denom = jnp.sum(p, axis=0, keepdims=True)                        # [1, D]
        att = jnp.sum(sb * p, axis=0, keepdims=True) / denom             # [1, D]

        outs.append(base + lam * att)

    out = jnp.concatenate(outs, axis=0)                                  # [B, D]
    # Bias enters exactly once: +b from the mean, +lam*b from the attention
    # term (sum of softmax == 1), i.e. (1 + lam) * b.
    out = out + (1.0 + lam) * b_ref[...]
    o_ref[...] = out.astype(o_ref.dtype)                                 # 1 store


def csra_forward(x, w, b, *, T=0.1, lam=0.5):
    """CSRA forward.

    x: [B, N, D]; w: [D, D] in [in, out] layout (nn.Linear.weight.T); b: [D].
    Returns [B, D].
    """
    B, N, D = x.shape
    assert w.shape == (D, D), "w must be [in, out] (pre-transposed nn.Linear weight)"
    assert b.shape == (D,)

    NP = ((N + 7) // 8) * 8                    # pad tokens to a sublane multiple
    x_pad = jnp.pad(x, ((0, 0), (0, NP - N), (0, 0)))
    x2 = x_pad.reshape(B * NP, D)              # contiguous, free wrapper reshape

    kernel = functools.partial(
        _csra_kernel, T=T, lam=lam, n_tokens=N, n_pad=NP, batch=B)

    # Single fused launch: total traffic is ~tens of KB, everything resident
    # in VMEM, weight DMA'd once.  If this head is called many times per step,
    # stack the instances and grid over them instead ("parallel") to amortize
    # the per-pallas_call launch cost.
    return pl.pallas_call(
        kernel,
        out_shape=jax.ShapeDtypeStruct((B, D), x.dtype),
        grid=(1,),
        in_specs=[
            pl.BlockSpec((B * NP, D), lambda i: (0, 0)),
            pl.BlockSpec((D, D), lambda i: (0, 0)),
            pl.BlockSpec((1, D), lambda i: (0, 0)),
        ],
        out_specs=pl.BlockSpec((B, D), lambda i: (0, 0)),
        compiler_params=pltpu.CompilerParams(
            dimension_semantics=("arbitrary",)),
    )(x2, w, b.reshape(1, D))


# ----------------------------------------------------------------------------
# Pure-JAX reference (mirrors the PyTorch semantics) for a sanity check
# ----------------------------------------------------------------------------

def csra_reference(x, w, b, T=0.1, lam=0.5):
    score = jnp.einsum("bnd,de->bne", x, w,
                       precision=lax.Precision.HIGHEST) + b
    base = jnp.mean(score, axis=1)
    soft = jax.nn.softmax(score * T, axis=1)
    att = jnp.sum(score * soft, axis=1)
    return base + lam * att


# ----------------------------------------------------------------------------
# Driver
# ----------------------------------------------------------------------------

if __name__ == "__main__":
    B, N, D = 2, 49, 32          # EGN uses 7*7 = 49 image tokens, dim = 32
    key = jax.random.PRNGKey(0)
    kx, kw, kb = jax.random.split(key, 3)

    x = jax.random.normal(kx, (B, N, D), jnp.float32)
    # nn.Linear weight, pre-transposed to [in, out]; bias as in PyTorch.
    w = jax.random.normal(kw, (D, D), jnp.float32) / math.sqrt(D)
    b = jax.random.normal(kb, (D,), jnp.float32) * 0.02

    fwd = jax.jit(functools.partial(csra_forward, T=0.1, lam=0.5))
    out = fwd(x, w, b)
    jax.block_until_ready(out)
    assert out.shape == (B, D), out.shape

    ref = csra_reference(x, w, b, T=0.1, lam=0.5)
    max_err = float(jnp.max(jnp.abs(out - ref)))
    assert jnp.allclose(out, ref, rtol=1e-2, atol=1e-2), max_err

    print("KERNEL_OK")
</pallas_src>

<mosaic_0001>
module attributes {stable_mosaic.version = 11 : i64} {
  func.func @_csra_kernel(%arg0: i32, %arg1: memref<112x32xf32, #tpu.memory_space<vmem>>, %arg2: memref<32x32xf32, #tpu.memory_space<vmem>>, %arg3: memref<1x32xf32, #tpu.memory_space<vmem>>, %arg4: memref<2x32xf32, #tpu.memory_space<vmem>>) attributes {dimension_semantics = [#tpu.dimension_semantics<arbitrary>], iteration_bounds = array<i64: 1>, scalar_prefetch = 0 : i64, scratch_operands = 0 : i64, tpu.core_type = #tpu.core_type<tc>, window_params = [{pipeline_mode = #tpu.pipeline_mode<synchronous>, transform_indices = @transform_0, window_bounds = array<i64: 112, 32>}, {pipeline_mode = #tpu.pipeline_mode<synchronous>, transform_indices = @transform_1, window_bounds = array<i64: 32, 32>}, {pipeline_mode = #tpu.pipeline_mode<synchronous>, transform_indices = @transform_2, window_bounds = array<i64: 1, 32>}, {pipeline_mode = #tpu.pipeline_mode<synchronous>, transform_indices = @transform_3, window_bounds = array<i64: 2, 32>}]} {
    %c0 = arith.constant 0 : index
    %c0_0 = arith.constant 0 : index
    %0 = vector.load %arg2[%c0, %c0_0] : memref<32x32xf32, #tpu.memory_space<vmem>>, vector<32x32xf32>
    %c0_1 = arith.constant 0 : index
    %c0_2 = arith.constant 0 : index
    %1 = vector.load %arg1[%c0_1, %c0_2] : memref<112x32xf32, #tpu.memory_space<vmem>>, vector<112x32xf32>
    %cst = arith.constant dense<0.000000e+00> : vector<112x32xf32>
    %2 = tpu.matmul %1, %0, %cst {dimension_numbers = #tpu.dot_dimension_numbers<[1], [0], [0], [1], [0, 0, 1, 1], [], []>} : vector<112x32xf32>, vector<32x32xf32>, vector<112x32xf32> -> vector<112x32xf32>
    %3 = tpu.iota {dimensions = array<i32: 0>} : vector<56x32xi32>
    %c49_i32 = arith.constant 49 : i32
    %4 = vector.broadcast %c49_i32 : i32 to vector<56x32xi32>
    %5 = arith.cmpi slt, %3, %4 : vector<56x32xi32>
    %cst_3 = arith.constant 0.000000e+00 : f32
    %cst_4 = arith.constant -1.000000e+30 : f32
    %6 = vector.broadcast %cst_3 : f32 to vector<56x32xf32>
    %7 = vector.broadcast %cst_4 : f32 to vector<56x32xf32>
    %8 = arith.select %5, %6, %7 : vector<56x32xi1>, vector<56x32xf32>
    %9 = vector.extract_strided_slice %2 {offsets = [0, 0], sizes = [56, 32], strides = [1, 1]} : vector<112x32xf32> to vector<56x32xf32>
    %cst_5 = arith.constant dense<0.000000e+00> : vector<32xf32>
    %10 = vector.multi_reduction <add>, %9, %cst_5 [0] : vector<56x32xf32> to vector<32xf32>
    %11 = vector.shape_cast %10 : vector<32xf32> to vector<1x32xf32>
    %cst_6 = arith.constant 0.0204081628 : f32
    %12 = vector.broadcast %cst_6 : f32 to vector<1x32xf32>
    %13 = arith.mulf %11, %12 : vector<1x32xf32>
    %cst_7 = arith.constant 1.000000e-01 : f32
    %14 = vector.broadcast %cst_7 : f32 to vector<56x32xf32>
    %15 = arith.mulf %9, %14 : vector<56x32xf32>
    %16 = arith.addf %15, %8 : vector<56x32xf32>
    %cst_8 = arith.constant dense<0xFF800000> : vector<32xf32>
    %17 = vector.multi_reduction <maximumf>, %16, %cst_8 [0] : vector<56x32xf32> to vector<32xf32>
    %18 = vector.shape_cast %17 : vector<32xf32> to vector<1x32xf32>
    %19 = vector.broadcast %18 : vector<1x32xf32> to vector<56x32xf32>
    %20 = arith.subf %16, %19 : vector<56x32xf32>
    %21 = math.exp %20 : vector<56x32xf32>
    %cst_9 = arith.constant dense<0.000000e+00> : vector<32xf32>
    %22 = vector.multi_reduction <add>, %21, %cst_9 [0] : vector<56x32xf32> to vector<32xf32>
    %23 = vector.shape_cast %22 : vector<32xf32> to vector<1x32xf32>
    %24 = arith.mulf %9, %21 : vector<56x32xf32>
    %cst_10 = arith.constant dense<0.000000e+00> : vector<32xf32>
    %25 = vector.multi_reduction <add>, %24, %cst_10 [0] : vector<56x32xf32> to vector<32xf32>
    %26 = vector.shape_cast %25 : vector<32xf32> to vector<1x32xf32>
    %27 = arith.divf %26, %23 : vector<1x32xf32>
    %cst_11 = arith.constant 5.000000e-01 : f32
    %28 = vector.broadcast %cst_11 : f32 to vector<1x32xf32>
    %29 = arith.mulf %28, %27 : vector<1x32xf32>
    %30 = arith.addf %13, %29 : vector<1x32xf32>
    %31 = vector.extract_strided_slice %2 {offsets = [56, 0], sizes = [56, 32], strides = [1, 1]} : vector<112x32xf32> to vector<56x32xf32>
    %cst_12 = arith.constant dense<0.000000e+00> : vector<32xf32>
    %32 = vector.multi_reduction <add>, %31, %cst_12 [0] : vector<56x32xf32> to vector<32xf32>
    %33 = vector.shape_cast %32 : vector<32xf32> to vector<1x32xf32>
    %cst_13 = arith.constant 0.0204081628 : f32
    %34 = vector.broadcast %cst_13 : f32 to vector<1x32xf32>
    %35 = arith.mulf %33, %34 : vector<1x32xf32>
    %cst_14 = arith.constant 1.000000e-01 : f32
    %36 = vector.broadcast %cst_14 : f32 to vector<56x32xf32>
    %37 = arith.mulf %31, %36 : vector<56x32xf32>
    %38 = arith.addf %37, %8 : vector<56x32xf32>
    %cst_15 = arith.constant dense<0xFF800000> : vector<32xf32>
    %39 = vector.multi_reduction <maximumf>, %38, %cst_15 [0] : vector<56x32xf32> to vector<32xf32>
    %40 = vector.shape_cast %39 : vector<32xf32> to vector<1x32xf32>
    %41 = vector.broadcast %40 : vector<1x32xf32> to vector<56x32xf32>
    %42 = arith.subf %38, %41 : vector<56x32xf32>
    %43 = math.exp %42 : vector<56x32xf32>
    %cst_16 = arith.constant dense<0.000000e+00> : vector<32xf32>
    %44 = vector.multi_reduction <add>, %43, %cst_16 [0] : vector<56x32xf32> to vector<32xf32>
    %45 = vector.shape_cast %44 : vector<32xf32> to vector<1x32xf32>
    %46 = arith.mulf %31, %43 : vector<56x32xf32>
    %cst_17 = arith.constant dense<0.000000e+00> : vector<32xf32>
    %47 = vector.multi_reduction <add>, %46, %cst_17 [0] : vector<56x32xf32> to vector<32xf32>
    %48 = vector.shape_cast %47 : vector<32xf32> to vector<1x32xf32>
    %49 = arith.divf %48, %45 : vector<1x32xf32>
    %cst_18 = arith.constant 5.000000e-01 : f32
    %50 = vector.broadcast %cst_18 : f32 to vector<1x32xf32>
    %51 = arith.mulf %50, %49 : vector<1x32xf32>
    %52 = arith.addf %35, %51 : vector<1x32xf32>
    %53 = tpu.concatenate %30, %52 in 0 : vector<1x32xf32>, vector<1x32xf32> -> vector<2x32xf32>
    %c0_19 = arith.constant 0 : index
    %c0_20 = arith.constant 0 : index
    %54 = vector.load %arg3[%c0_19, %c0_20] : memref<1x32xf32, #tpu.memory_space<vmem>>, vector<1x32xf32>
    %cst_21 = arith.constant 1.500000e+00 : f32
    %55 = vector.broadcast %cst_21 : f32 to vector<1x32xf32>
    %56 = arith.mulf %55, %54 : vector<1x32xf32>
    %57 = vector.broadcast %56 : vector<1x32xf32> to vector<2x32xf32>
    %58 = arith.addf %53, %57 : vector<2x32xf32>
    %c0_22 = arith.constant 0 : index
    %c0_23 = arith.constant 0 : index
    %59 = vector.load %arg4[%c0_22, %c0_23] : memref<2x32xf32, #tpu.memory_space<vmem>>, vector<2x32xf32>
    tpu.vector_store %arg4[%c0_22, %c0_23], %58 {strides = array<i32>} : memref<2x32xf32, #tpu.memory_space<vmem>>, vector<2x32xf32>,
    return
  }
  func.func @transform_0(%arg0: i32) -> (i32, i32) {
    %c0_i32 = arith.constant 0 : i32
    %c0_i32_0 = arith.constant 0 : i32
    %c0_i32_1 = arith.constant 0 : i32
    return %c0_i32, %c0_i32_0 : i32, i32
  }
  func.func @transform_1(%arg0: i32) -> (i32, i32) {
    %c0_i32 = arith.constant 0 : i32
    %c0_i32_0 = arith.constant 0 : i32
    %c0_i32_1 = arith.constant 0 : i32
    return %c0_i32, %c0_i32_0 : i32, i32
  }
  func.func @transform_2(%arg0: i32) -> (i32, i32) {
    %c0_i32 = arith.constant 0 : i32
    %c0_i32_0 = arith.constant 0 : i32
    %c0_i32_1 = arith.constant 0 : i32
    return %c0_i32, %c0_i32_0 : i32, i32
  }
  func.func @transform_3(%arg0: i32) -> (i32, i32) {
    %c0_i32 = arith.constant 0 : i32
    %c0_i32_0 = arith.constant 0 : i32
    %c0_i32_1 = arith.constant 0 : i32
    return %c0_i32, %c0_i32_0 : i32, i32
  }
}

</mosaic_0001>

<llo_original>
// kernel: csra_forward.1
$region0: #{csra_forward.1}
  #allocation0 [shape = 'u32[]', space=smem, size = 0x4, offset = 0x4, fixed_abs, tag = 'smem constant byte address 0x4 - core index']
  #allocation1 [shape = 'u32[144,128]{1,0:T(1,128)}', space=vmem, size = 0x12000, scoped, tag = 'internal scratch']
  %s0 = inlined_call_operand.vmem [shape: f32[112,32], index: 0, kind: input, shape index: {}]
  %s1 = inlined_call_operand.vmem [shape: f32[32,32], index: 1, kind: input, shape index: {}]
  %s2 = inlined_call_operand.vmem [shape: f32[1,32], index: 2, kind: input, shape index: {}]
  %s3 = inlined_call_operand.hbm [shape: f32[2,32], index: 3, kind: output, shape index: {}]
  %s4 = sld [smem:[#allocation0]]
  $region22: #{csra_forward.1} parent=0
    _
  %s6 = ssub.s32 1, %s4
  %s7 = scalar_select 0, %s6, %s4
  $region1: #{csra_forward.1} parent=0
    #allocation2 [shape = 'u8[1024]{0}', space=vmem, size = 0x400, scoped, tag = 'output window, operand 0, single buffered']
    #allocation3 [shape = 's32[1]{0}', space=sflag, size = 0x4, scoped, tag = 'scoped memory for csra_forward.1']
    %8 = vsyncpa [#allocation3], 0
    // Predicated region
    $region2: #{csra_forward.1} parent=1 // pred_check
      _
    $region3: #{csra_forward.1} parent=1 // pred_check_branch
      %10 = sbr.rel (0) target = $region5
    $region4: #{csra_forward.1} parent=1 // pred_region
      _
    $region5: #{csra_forward.1} parent=1 // pred_fallthru
      _
    // Predicated region
    $region6: #{csra_forward.1} parent=1 // pred_check
      _
    $region7: #{csra_forward.1} parent=1 // pred_check_branch
      %12 = sbr.rel (0) target = $region9
    $region8: #{csra_forward.1} parent=1 // pred_region
      _
    $region9: #{csra_forward.1} parent=1 // pred_fallthru
      _
    // Predicated region
    $region10: #{csra_forward.1} parent=1 // pred_check
      _
    $region11: #{csra_forward.1} parent=1 // pred_check_branch
      %14 = sbr.rel (0) target = $region13
    $region12: #{csra_forward.1} parent=1 // pred_region
      _
    $region13: #{csra_forward.1} parent=1 // pred_fallthru
      _
    %v15 = vld [vmem:[%s1] sm:$0xff]
    %v16 = vld [vmem:[%s1 + $0x8] sm:$0xff]
    %v17 = vld [vmem:[%s1 + $0x10] sm:$0xff]
    %v18 = vld [vmem:[%s1 + $0x18] sm:$0xff]
    %v19 = vld [vmem:[%s0] sm:$0xff]
    %v20 = vld [vmem:[%s0 + $0x8] sm:$0xff]
    %v21 = vld [vmem:[%s0 + $0x10] sm:$0xff]
    %v22 = vld [vmem:[%s0 + $0x18] sm:$0xff]
    %v23 = vld [vmem:[%s0 + $0x20] sm:$0xff]
    %v24 = vld [vmem:[%s0 + $0x28] sm:$0xff]
    %v25 = vld [vmem:[%s0 + $0x30] sm:$0xff]
    %v26 = vld [vmem:[%s0 + $0x38] sm:$0xff]
    %v27 = vld [vmem:[%s0 + $0x40] sm:$0xff]
    %v28 = vld [vmem:[%s0 + $0x48] sm:$0xff]
    %v29 = vld [vmem:[%s0 + $0x50] sm:$0xff]
    %v30 = vld [vmem:[%s0 + $0x58] sm:$0xff]
    %v31 = vld [vmem:[%s0 + $0x60] sm:$0xff]
    %v32 = vld [vmem:[%s0 + $0x68] sm:$0xff]
    %vm33 = vcmask 261120
    %v35 = vsel %vm33, %v19, 0
    %v38 = vsel %vm33, %v20, 0
    %v41 = vsel %vm33, %v21, 0
    %v44 = vsel %vm33, %v22, 0
    %v47 = vsel %vm33, %v23, 0
    %v50 = vsel %vm33, %v24, 0
    %v53 = vsel %vm33, %v25, 0
    %v56 = vsel %vm33, %v26, 0
    %v59 = vsel %vm33, %v27, 0
    %v62 = vsel %vm33, %v28, 0
    %v65 = vsel %vm33, %v29, 0
    %v68 = vsel %vm33, %v30, 0
    %v71 = vsel %vm33, %v31, 0
    %v74 = vsel %vm33, %v32, 0
    %76 = vmatprep.subr.mxu0 0.0
    %77 = vmatpush1.msra.mxu0 %v15
    %78 = vmatprep.subr.mxu0 0.0
    %79 = vmatpush1.msra.mxu0 %v16
    %80 = vmatprep.subr.mxu0 0.0
    %81 = vmatpush1.msra.mxu0 %v17
    %82 = vmatprep.subr.mxu0 0.0
    %83 = vmatpush1.msra.mxu0 %v18
    %84 = vmatprep.subr.mxu0 0.0
    %85 = vmatpush1.msra.mxu0 0.0
    %86 = vmatprep.subr.mxu0 0.0
    %87 = vmatpush1.msra.mxu0 0.0
    %88 = vmatprep.subr.mxu0 0.0
    %89 = vmatpush1.msra.mxu0 0.0
    %90 = vmatprep.subr.mxu0 0.0
    %91 = vmatpush1.msra.mxu0 0.0
    %92 = vmatprep.subr.mxu0 0.0
    %93 = vmatpush1.msra.mxu0 0.0
    %94 = vmatprep.subr.mxu0 0.0
    %95 = vmatpush1.msra.mxu0 0.0
    %96 = vmatprep.subr.mxu0 0.0
    %97 = vmatpush1.msra.mxu0 0.0
    %98 = vmatprep.subr.mxu0 0.0
    %99 = vmatpush1.msra.mxu0 0.0
    %100 = vmatprep.subr.mxu0 0.0
    %101 = vmatpush1.msra.mxu0 0.0
    %102 = vmatprep.subr.mxu0 0.0
    %103 = vmatpush1.msra.mxu0 0.0
    %104 = vmatprep.subr.mxu0 0.0
    %105 = vmatpush1.msra.mxu0 0.0
    %106 = vmatprep.subr.mxu0 0.0
    %107 = vmatpush1.msra.mxu0 0.0
    %108 = vmatprep.subr.mxu0 0.0
    %109 = vmatpush1.msra.mxu0 0.0
    %110 = vmatprep.subr.mxu0 0.0
    %111 = vmatpush1.msra.mxu0 0.0
    %112 = vmatprep.subr.mxu0 0.0
    %113 = vmatpush1.msra.mxu0 0.0
    %114 = vmatprep.subr.mxu0 0.0
    %115 = vmatpush1.msra.mxu0 0.0
    %116 = vmatprep.subr.mxu0 0.0
    %117 = vmatpush1.msra.mxu0 0.0
    %118 = vmatprep.subr.mxu0 0.0
    %119 = vmatpush1.msra.mxu0 0.0
    %120 = vmatprep.subr.mxu0 0.0
    %121 = vmatpush1.msra.mxu0 0.0
    %122 = vmatprep.subr.mxu0 0.0
    %123 = vmatpush1.msra.mxu0 0.0
    %124 = vmatprep.subr.mxu0 0.0
    %125 = vmatpush1.msra.mxu0 0.0
    %126 = vmatprep.subr.mxu0 0.0
    %127 = vmatpush1.msra.mxu0 0.0
    %128 = vmatprep.subr.mxu0 0.0
    %129 = vmatpush1.msra.mxu0 0.0
    %130 = vmatprep.subr.mxu0 0.0
    %131 = vmatpush1.msra.mxu0 0.0
    %132 = vmatprep.subr.mxu0 0.0
    %133 = vmatpush1.msra.mxu0 0.0
    %134 = vmatprep.subr.mxu0 0.0
    %135 = vmatpush1.msra.mxu0 0.0
    %136 = vmatprep.subr.mxu0 0.0
    %137 = vmatpush1.msra.mxu0 0.0
    %138 = vmatprep.subr.mxu0 0.0
    %139 = vmatpush1.msra.mxu0 0.0
    %140 = vmatprep.mubr.f32.mxu0 0.0
    %141 = vmatmul.mubr.f32.gmra.mrb[0].mxu0 %v35
    %v142 = vpop.f32.mrb[0].mxu0
    %v143 = vadd.f32 0.0, %v142
    %v144 = vpop.f32.mrb[0].mxu0
    %145 = vmatprep.mubr.f32.mxu0 0.0
    %146 = vmatmul.mubr.f32.gmra.mrb[0].mxu0 %v38
    %v147 = vpop.f32.mrb[0].mxu0
    %v148 = vadd.f32 0.0, %v147
    %v149 = vpop.f32.mrb[0].mxu0
    %150 = vmatprep.mubr.f32.mxu0 0.0
    %151 = vmatmul.mubr.f32.gmra.mrb[0].mxu0 %v41
    %v152 = vpop.f32.mrb[0].mxu0
    %v153 = vadd.f32 0.0, %v152
    %v154 = vpop.f32.mrb[0].mxu0
    %155 = vmatprep.mubr.f32.mxu0 0.0
    %156 = vmatmul.mubr.f32.gmra.mrb[0].mxu0 %v44
    %v157 = vpop.f32.mrb[0].mxu0
    %v158 = vadd.f32 0.0, %v157
    %v159 = vpop.f32.mrb[0].mxu0
    %160 = vmatprep.mubr.f32.mxu0 0.0
    %161 = vmatmul.mubr.f32.gmra.mrb[0].mxu0 %v47
    %v162 = vpop.f32.mrb[0].mxu0
    %v163 = vadd.f32 0.0, %v162
    %v164 = vpop.f32.mrb[0].mxu0
    %165 = vmatprep.mubr.f32.mxu0 0.0
    %166 = vmatmul.mubr.f32.gmra.mrb[0].mxu0 %v50
    %v167 = vpop.f32.mrb[0].mxu0
    %v168 = vadd.f32 0.0, %v167
    %v169 = vpop.f32.mrb[0].mxu0
    %170 = vmatprep.mubr.f32.mxu0 0.0
    %171 = vmatmul.mubr.f32.gmra.mrb[0].mxu0 %v53
    %v172 = vpop.f32.mrb[0].mxu0
    %v173 = vadd.f32 0.0, %v172
    %v174 = vpop.f32.mrb[0].mxu0
    %175 = vmatprep.mubr.f32.mxu0 0.0
    %176 = vmatmul.mubr.f32.gmra.mrb[0].mxu0 %v56
    %v177 = vpop.f32.mrb[0].mxu0
    %v178 = vadd.f32 0.0, %v177
    %v179 = vpop.f32.mrb[0].mxu0
    %180 = vmatprep.mubr.f32.mxu0 0.0
    %181 = vmatmul.mubr.f32.gmra.mrb[0].mxu0 %v59
    %v182 = vpop.f32.mrb[0].mxu0
    %v183 = vadd.f32 0.0, %v182
    %v184 = vpop.f32.mrb[0].mxu0
    %185 = vmatprep.mubr.f32.mxu0 0.0
    %186 = vmatmul.mubr.f32.gmra.mrb[0].mxu0 %v62
    %v187 = vpop.f32.mrb[0].mxu0
    %v188 = vadd.f32 0.0, %v187
    %v189 = vpop.f32.mrb[0].mxu0
    %190 = vmatprep.mubr.f32.mxu0 0.0
    %191 = vmatmul.mubr.f32.gmra.mrb[0].mxu0 %v65
    %v192 = vpop.f32.mrb[0].mxu0
    %v193 = vadd.f32 0.0, %v192
    %v194 = vpop.f32.mrb[0].mxu0
    %195 = vmatprep.mubr.f32.mxu0 0.0
    %196 = vmatmul.mubr.f32.gmra.mrb[0].mxu0 %v68
    %v197 = vpop.f32.mrb[0].mxu0
    %v198 = vadd.f32 0.0, %v197
    %v199 = vpop.f32.mrb[0].mxu0
    %200 = vmatprep.mubr.f32.mxu0 0.0
    %201 = vmatmul.mubr.f32.gmra.mrb[0].mxu0 %v71
    %v202 = vpop.f32.mrb[0].mxu0
    %v203 = vadd.f32 0.0, %v202
    %v204 = vpop.f32.mrb[0].mxu0
    %205 = vmatprep.mubr.f32.mxu0 0.0
    %206 = vmatmul.mubr.f32.gmra.mrb[0].mxu0 %v74
    %v207 = vpop.f32.mrb[0].mxu0
    %v208 = vadd.f32 0.0, %v207
    %v209 = vpop.f32.mrb[0].mxu0
    %210 = vdwg.mxu0
    %v211 = vlaneseq
    %v212 = vshrl.u32 %v211, 7
    %v213 = vadd.s32 %v212, 8
    %v214 = vadd.s32 %v212, 16
    %v215 = vadd.s32 %v212, 24
    %v216 = vadd.s32 %v212, 32
    %v217 = vadd.s32 %v212, 40
    %v218 = vadd.s32 %v212, 48
    %vm219 = vcmp.lt.s32.totalorder %v212, 49
    %vm220 = vcmp.lt.s32.totalorder %v213, 49
    %vm221 = vcmp.lt.s32.totalorder %v214, 49
    %vm222 = vcmp.lt.s32.totalorder %v215, 49
    %vm223 = vcmp.lt.s32.totalorder %v216, 49
    %vm224 = vcmp.lt.s32.totalorder %v217, 49
    %vm225 = vcmp.lt.s32.totalorder %v218, 49
    %v226 = vsel %vm219, 0.0, -1e+30
    %v227 = vsel %vm220, 0.0, -1e+30
    %v228 = vsel %vm221, 0.0, -1e+30
    %v229 = vsel %vm222, 0.0, -1e+30
    %v230 = vsel %vm223, 0.0, -1e+30
    %v231 = vsel %vm224, 0.0, -1e+30
    %v232 = vsel %vm225, 0.0, -1e+30
    %v233 = vsel %vm33, %v143, 0.0
    %v234 = vsel %vm33, %v148, 0.0
    %v235 = vadd.f32 %v233, %v234
    %v236 = vsel %vm33, %v153, 0.0
    %v237 = vadd.f32 %v235, %v236
    %v238 = vsel %vm33, %v158, 0.0
    %v239 = vadd.f32 %v237, %v238
    %v240 = vsel %vm33, %v163, 0.0
    %v241 = vadd.f32 %v239, %v240
    %v242 = vsel %vm33, %v168, 0.0
    %v243 = vadd.f32 %v241, %v242
    %v244 = vsel %vm33, %v173, 0.0
    %v245 = vadd.f32 %v243, %v244
    %v246 = vrot.slane %v245, 4
    %v247 = vadd.f32 %v245, %v246
    %v248 = vrot.slane %v247, 2
    %v249 = vadd.f32 %v247, %v248
    %v250 = vrot.slane %v249, 1
    %v251 = vadd.f32 %v249, %v250
    %v252 = vmul.f32 %v251, 0.020408163
    %v253 = vmul.f32 %v143, 0.1
    %v254 = vmul.f32 %v148, 0.1
    %v255 = vmul.f32 %v153, 0.1
    %v256 = vmul.f32 %v158, 0.1
    %v257 = vmul.f32 %v163, 0.1
    %v258 = vmul.f32 %v168, 0.1
    %v259 = vmul.f32 %v173, 0.1
    %v260 = vadd.f32 %v253, %v226
    %v261 = vadd.f32 %v254, %v227
    %v262 = vadd.f32 %v255, %v228
    %v263 = vadd.f32 %v256, %v229
    %v264 = vadd.f32 %v257, %v230
    %v265 = vadd.f32 %v258, %v231
    %v266 = vadd.f32 %v259, %v232
    %v267 = vsel %vm33, %v260, -inf
    %v268 = vsel %vm33, %v261, -inf
    %v269 = vsel %vm33, %v262, -inf
    %v270 = vsel %vm33, %v263, -inf
    %v271 = vsel %vm33, %v264, -inf
    %v272 = vmax.f32 %v267, %v271
    %v273 = vsel %vm33, %v265, -inf
    %v274 = vmax.f32 %v268, %v273
    %v275 = vsel %vm33, %v266, -inf
    %v276 = vmax.f32 %v269, %v275
    %v277 = vmax.f32 %v272, %v274
    %v278 = vmax.f32 %v276, %v270
    %v279 = vmax.f32 %v277, %v278
    %v280 = vrot.slane %v279, 4
    %v281 = vmax.f32 %v279, %v280
    %v282 = vrot.slane %v281, 2
    %v283 = vmax.f32 %v281, %v282
    %v284 = vrot.slane %v283, 1
    %v285 = vmax.f32 %v283, %v284
    %v286 = vsub.f32 %v260, %v285
    %v287 = vsub.f32 %v261, %v285
    %v288 = vsub.f32 %v262, %v285
    %v289 = vsub.f32 %v263, %v285
    %v290 = vsub.f32 %v264, %v285
    %v291 = vsub.f32 %v265, %v285
    %v292 = vsub.f32 %v266, %v285
    %v293 = vmul.f32 %v286, 1.442695
    %v294 = vpow.pop %v293
    %v295 = vmul.f32 %v287, 1.442695
    %v296 = vpow.pop %v295
    %v297 = vmul.f32 %v288, 1.442695
    %v298 = vpow.pop %v297
    %v299 = vmul.f32 %v289, 1.442695
    %v300 = vpow.pop %v299
    %v301 = vmul.f32 %v290, 1.442695
    %v302 = vpow.pop %v301
    %v303 = vmul.f32 %v291, 1.442695
    %v304 = vpow.pop %v303
    %v305 = vmul.f32 %v292, 1.442695
    %v306 = vpow.pop %v305
    %v307 = vsel %vm33, %v294, 0.0
    %v308 = vsel %vm33, %v296, 0.0
    %v309 = vadd.f32 %v307, %v308
    %v310 = vsel %vm33, %v298, 0.0
    %v311 = vadd.f32 %v309, %v310
    %v312 = vsel %vm33, %v300, 0.0
    %v313 = vadd.f32 %v311, %v312
    %v314 = vsel %vm33, %v302, 0.0
    %v315 = vadd.f32 %v313, %v314
    %v316 = vsel %vm33, %v304, 0.0
    %v317 = vadd.f32 %v315, %v316
    %v318 = vsel %vm33, %v306, 0.0
    %v319 = vadd.f32 %v317, %v318
    %v320 = vrot.slane %v319, 4
    %v321 = vadd.f32 %v319, %v320
    %v322 = vrot.slane %v321, 2
    %v323 = vadd.f32 %v321, %v322
    %v324 = vrot.slane %v323, 1
    %v325 = vadd.f32 %v323, %v324
    %v326 = vmul.f32 %v143, %v294
    %v327 = vmul.f32 %v148, %v296
    %v328 = vmul.f32 %v153, %v298
    %v329 = vmul.f32 %v158, %v300
    %v330 = vmul.f32 %v163, %v302
    %v331 = vmul.f32 %v168, %v304
    %v332 = vmul.f32 %v173, %v306
    %v333 = vsel %vm33, %v326, 0.0
    %v334 = vsel %vm33, %v327, 0.0
    %v335 = vadd.f32 %v333, %v334
    %v336 = vsel %vm33, %v328, 0.0
    %v337 = vadd.f32 %v335, %v336
    %v338 = vsel %vm33, %v329, 0.0
    %v339 = vadd.f32 %v337, %v338
    %v340 = vsel %vm33, %v330, 0.0
    %v341 = vadd.f32 %v339, %v340
    %v342 = vsel %vm33, %v331, 0.0
    %v343 = vadd.f32 %v341, %v342
    %v344 = vsel %vm33, %v332, 0.0
    %v345 = vadd.f32 %v343, %v344
    %v346 = vrot.slane %v345, 4
    %v347 = vadd.f32 %v345, %v346
    %v348 = vrot.slane %v347, 2
    %v349 = vadd.f32 %v347, %v348
    %v350 = vrot.slane %v349, 1
    %v351 = vadd.f32 %v349, %v350
    %v352 = vrcp.pop %v325
    %v353 = vmul.f32 %v351, %v352
    %v354 = vmul.f32 %v353, 0.5
    %v355 = vadd.f32 %v252, %v354
    %v356 = vsel %vm33, %v178, 0.0
    %v357 = vsel %vm33, %v183, 0.0
    %v358 = vadd.f32 %v356, %v357
    %v359 = vsel %vm33, %v188, 0.0
    %v360 = vadd.f32 %v358, %v359
    %v361 = vsel %vm33, %v193, 0.0
    %v362 = vadd.f32 %v360, %v361
    %v363 = vsel %vm33, %v198, 0.0
    %v364 = vadd.f32 %v362, %v363
    %v365 = vsel %vm33, %v203, 0.0
    %v366 = vadd.f32 %v364, %v365
    %v367 = vsel %vm33, %v208, 0.0
    %v368 = vadd.f32 %v366, %v367
    %v369 = vrot.slane %v368, 4
    %v370 = vadd.f32 %v368, %v369
    %v371 = vrot.slane %v370, 2
    %v372 = vadd.f32 %v370, %v371
    %v373 = vrot.slane %v372, 1
    %v374 = vadd.f32 %v372, %v373
    %v375 = vmul.f32 %v374, 0.020408163
    %v376 = vmul.f32 %v178, 0.1
    %v377 = vmul.f32 %v183, 0.1
    %v378 = vmul.f32 %v188, 0.1
    %v379 = vmul.f32 %v193, 0.1
    %v380 = vmul.f32 %v198, 0.1
    %v381 = vmul.f32 %v203, 0.1
    %v382 = vmul.f32 %v208, 0.1
    %v383 = vadd.f32 %v376, %v226
    %v384 = vadd.f32 %v377, %v227
    %v385 = vadd.f32 %v378, %v228
    %v386 = vadd.f32 %v379, %v229
    %v387 = vadd.f32 %v380, %v230
    %v388 = vadd.f32 %v381, %v231
    %v389 = vadd.f32 %v382, %v232
    %v390 = vsel %vm33, %v383, -inf
    %v391 = vsel %vm33, %v384, -inf
    %v392 = vsel %vm33, %v385, -inf
    %v393 = vsel %vm33, %v386, -inf
    %v394 = vsel %vm33, %v387, -inf
    %v395 = vmax.f32 %v390, %v394
    %v396 = vsel %vm33, %v388, -inf
    %v397 = vmax.f32 %v391, %v396
    %v398 = vsel %vm33, %v389, -inf
    %v399 = vmax.f32 %v392, %v398
    %v400 = vmax.f32 %v395, %v397
    %v401 = vmax.f32 %v399, %v393
    %v402 = vmax.f32 %v400, %v401
    %v403 = vrot.slane %v402, 4
    %v404 = vmax.f32 %v402, %v403
    %v405 = vrot.slane %v404, 2
    %v406 = vmax.f32 %v404, %v405
    %v407 = vrot.slane %v406, 1
    %v408 = vmax.f32 %v406, %v407
    %v409 = vsub.f32 %v383, %v408
    %v410 = vsub.f32 %v384, %v408
    %v411 = vsub.f32 %v385, %v408
    %v412 = vsub.f32 %v386, %v408
    %v413 = vsub.f32 %v387, %v408
    %v414 = vsub.f32 %v388, %v408
    %v415 = vsub.f32 %v389, %v408
    %v416 = vmul.f32 %v409, 1.442695
    %v417 = vpow.pop %v416
    %v418 = vmul.f32 %v410, 1.442695
    %v419 = vpow.pop %v418
    %v420 = vmul.f32 %v411, 1.442695
    %v421 = vpow.pop %v420
    %v422 = vmul.f32 %v412, 1.442695
    %v423 = vpow.pop %v422
    %v424 = vmul.f32 %v413, 1.442695
    %v425 = vpow.pop %v424
    %v426 = vmul.f32 %v414, 1.442695
    %v427 = vpow.pop %v426
    %v428 = vmul.f32 %v415, 1.442695
    %v429 = vpow.pop %v428
    %v430 = vsel %vm33, %v417, 0.0
    %v431 = vsel %vm33, %v419, 0.0
    %v432 = vadd.f32 %v430, %v431
    %v433 = vsel %vm33, %v421, 0.0
    %v434 = vadd.f32 %v432, %v433
    %v435 = vsel %vm33, %v423, 0.0
    %v436 = vadd.f32 %v434, %v435
    %v437 = vsel %vm33, %v425, 0.0
    %v438 = vadd.f32 %v436, %v437
    %v439 = vsel %vm33, %v427, 0.0
    %v440 = vadd.f32 %v438, %v439
    %v441 = vsel %vm33, %v429, 0.0
    %v442 = vadd.f32 %v440, %v441
    %v443 = vrot.slane %v442, 4
    %v444 = vadd.f32 %v442, %v443
    %v445 = vrot.slane %v444, 2
    %v446 = vadd.f32 %v444, %v445
    %v447 = vrot.slane %v446, 1
    %v448 = vadd.f32 %v446, %v447
    %v449 = vmul.f32 %v178, %v417
    %v450 = vmul.f32 %v183, %v419
    %v451 = vmul.f32 %v188, %v421
    %v452 = vmul.f32 %v193, %v423
    %v453 = vmul.f32 %v198, %v425
    %v454 = vmul.f32 %v203, %v427
    %v455 = vmul.f32 %v208, %v429
    %v456 = vsel %vm33, %v449, 0.0
    %v457 = vsel %vm33, %v450, 0.0
    %v458 = vadd.f32 %v456, %v457
    %v459 = vsel %vm33, %v451, 0.0
    %v460 = vadd.f32 %v458, %v459
    %v461 = vsel %vm33, %v452, 0.0
    %v462 = vadd.f32 %v460, %v461
    %v463 = vsel %vm33, %v453, 0.0
    %v464 = vadd.f32 %v462, %v463
    %v465 = vsel %vm33, %v454, 0.0
    %v466 = vadd.f32 %v464, %v465
    %v467 = vsel %vm33, %v455, 0.0
    %v468 = vadd.f32 %v466, %v467
    %v469 = vrot.slane %v468, 4
    %v470 = vadd.f32 %v468, %v469
    %v471 = vrot.slane %v470, 2
    %v472 = vadd.f32 %v470, %v471
    %v473 = vrot.slane %v472, 1
    %v474 = vadd.f32 %v472, %v473
    %v475 = vrcp.pop %v448
    %v476 = vmul.f32 %v474, %v475
    %v477 = vmul.f32 %v476, 0.5
    %v478 = vadd.f32 %v375, %v477
    %vm479 = vcmask 1040384
    %v480 = vsel %vm479, %v355, %v478
    %v481 = vld [vmem:[%s2] sm:$0x1]
    %v482 = vmul.f32 %v481, 1.5
    %v484 = vlaneseq
    %v485 = vshrl.u32 %v484, 7
    %v486 = vsub.s32 0, %v485
    %v487 = vrot.slane %v482, %v486
    %v489 = vadd.f32 %v480, %v487
    %vm490 = vcmask 254976
    %491 = vst.msk [vmem:[#allocation2] sm:$0x3] %vm490, %v489
    // Predicated region
    $region14: #{csra_forward.1} parent=1 // pred_check
      _
    $region15: #{csra_forward.1} parent=1 // pred_check_branch
      %493 = sbr.rel (0) target = $region17
    $region16: #{csra_forward.1} parent=1 // pred_region
      %s495 = ssub.s32 32, 32
      %496 = vsyncadd [#allocation3], %s495
      %s498 = sshll.u32 [#allocation2], 4
      %s499 = int_to_ptr.vmem [resolvable:$true] %s498
      %501 = dma.vmem_to_hbm [thread:$0]  %s499, 32, %s3, [#allocation3]
    $region17: #{csra_forward.1} parent=1 // pred_fallthru
      _
    // Predicated region
    $region18: #{csra_forward.1} parent=1 // pred_check
      _
    $region19: #{csra_forward.1} parent=1 // pred_check_branch
      %503 = sbr.rel (0) target = $region21
    $region20: #{csra_forward.1} parent=1 // pred_region
      %504 = dma.done [#allocation3], 32
    $region21: #{csra_forward.1} parent=1 // pred_fallthru
      _
    %505 = vsyncpa [#allocation3], 1

</llo_original>
